<compile_context>
chip_gen: v7x
topology: tpu7x:2x2x1
jax: 0.10.0
libtpu: 0.0.40
codegen_flags: <defaults>
</compile_context>

<pallas_src>
import jax
import jax.numpy as jnp
from jax.experimental import pallas as pl
from jax.experimental.pallas import tpu as pltpu

EPS = 1e-5
NEG_SLOPE = 0.3


def _degateconv_kernel(x_ref, w1_ref, w2_ref, aff_ref, out_ref):
    # x_ref  : (Nb, Cin2, HW)
    # w1_ref : (Cmid, Cin2)
    # w2_ref : (2*Cout, Cmid)     rows [0:Cout] = kh=0 (even), [Cout:] = kh=1 (odd)
    # aff_ref: (2*Cmid + 2*Cout, 1)  packed [gamma1; beta1; gamma2; beta2]
    # out_ref: (Nb, 2*Cout, HW)   channels [0:Cout] = even rows, [Cout:] = odd rows
    nb, _, hw = x_ref.shape
    cmid = w1_ref.shape[0]
    cout = w2_ref.shape[0] // 2

    # Hoist weights / affine params / constants out of the per-batch loop.
    w1 = w1_ref[...]
    w2 = w2_ref[...]
    aff = aff_ref[...]
    g1 = aff[0:cmid]
    b1 = aff[cmid:2 * cmid]
    g2 = aff[2 * cmid:2 * cmid + cout]
    b2 = aff[2 * cmid + cout:2 * cmid + 2 * cout]

    inv_hw = jnp.float32(1.0 / hw)
    inv_2hw = jnp.float32(0.5 / hw)

    for n in range(nb):  # nb is a small static int (capped in the wrapper)
        xb = x_ref[n]                                               # (Cin2, HW)

        # ---- in_conv: 1x1 conv == channel matmul ---------------------------
        y = jnp.dot(w1, xb, preferred_element_type=jnp.float32)    # (Cmid, HW)

        # InstanceNorm over HW, one-pass moments (biased variance).
        s1 = jnp.sum(y, axis=1, keepdims=True)
        q1 = jnp.sum(y * y, axis=1, keepdims=True)
        mean1 = s1 * inv_hw
        var1 = jnp.maximum(q1 * inv_hw - mean1 * mean1, 0.0)
        sc1 = g1 * jax.lax.rsqrt(var1 + EPS)
        sh1 = b1 - mean1 * sc1
        y = y * sc1 + sh1
        y = jnp.maximum(y, NEG_SLOPE * y)                           # leaky_relu

        # ---- out_conv: ConvTranspose2d (2,1)/(2,1), even+odd fused ---------
        z = jnp.dot(w2, y, preferred_element_type=jnp.float32)     # (2*Cout, HW)

        # InstanceNorm over the full (2H, W) output: combine per-half moments.
        sr = jnp.sum(z, axis=1, keepdims=True)                      # (2*Cout, 1)
        qr = jnp.sum(z * z, axis=1, keepdims=True)
        s2 = sr[:cout] + sr[cout:]                                  # (Cout, 1)
        q2 = qr[:cout] + qr[cout:]
        mean2 = s2 * inv_2hw
        var2 = jnp.maximum(q2 * inv_2hw - mean2 * mean2, 0.0)
        sc2 = g2 * jax.lax.rsqrt(var2 + EPS)
        sh2 = b2 - mean2 * sc2
        sc2f = jnp.concatenate([sc2, sc2], axis=0)                  # (2*Cout, 1)
        sh2f = jnp.concatenate([sh2, sh2], axis=0)
        z = z * sc2f + sh2f
        z = jnp.maximum(z, NEG_SLOPE * z)                           # leaky_relu

        out_ref[n] = z                                              # full-tile store


def _choose_nb(n, cin2, cout, hw, target_bytes=2 << 20, max_nb=8):
    """Batches per grid step: aim for a few-MiB block, keep >= 2 grid steps."""
    per_batch = 4 * hw * (cin2 + 2 * cout)
    nb = max(1, min(max_nb, target_bytes // max(per_batch, 1)))
    nb = int(min(nb, n))
    while nb > 1 and n // nb < 2:      # keep both TensorCores busy (v7x megacore)
        nb -= 1
    while n % nb != 0:                 # simple divisibility; fine for small N
        nb -= 1
    return int(nb)


@jax.jit
def degateconv_audio_forward(x, w1, gamma1, beta1, w2_stack, gamma2, beta2):
    """x: (N, Cin2, H, W) float32 (NCHW, like PyTorch). Returns (N, Cout, 2H, W)."""
    N, Cin2, H, W = x.shape
    Cmid = w1.shape[0]
    Cout = w2_stack.shape[1]
    HW = H * W

    x_flat = x.reshape(N, Cin2, HW)
    w2_flat = w2_stack.reshape(2 * Cout, Cmid)            # [even rows; odd rows]
    affine = jnp.concatenate([gamma1, beta1, gamma2, beta2]).reshape(-1, 1)
    n_aff = 2 * (Cmid + Cout)

    Nb = _choose_nb(N, Cin2, Cout, HW)
    grid_n = N // Nb

    # Explicit VMEM budget: double-buffered in/out blocks + in-kernel
    # intermediates + ~1 MiB slack; clamp to [32 MiB, 64 MiB] (safe on v5e/v6e/v7x).
    est = 4 * HW * (2 * Nb * (Cin2 + 2 * Cout) + Cmid + 2 * Cout) + (1 << 20)
    vmem_limit = int(min(64 << 20, max(32 << 20, 2 * est)))

    out = pl.pallas_call(
        _degateconv_kernel,
        out_shape=jax.ShapeDtypeStruct((N, 2 * Cout, HW), jnp.float32),
        grid_spec=pltpu.PrefetchScalarGridSpec(
            num_scalar_prefetch=0,
            grid=(grid_n,),
            in_specs=[
                pl.BlockSpec((Nb, Cin2, HW), lambda b: (b, 0, 0)),
                pl.BlockSpec((Cmid, Cin2), lambda b: (0, 0)),
                pl.BlockSpec((2 * Cout, Cmid), lambda b: (0, 0)),
                pl.BlockSpec((n_aff, 1), lambda b: (0, 0)),
            ],
            out_specs=pl.BlockSpec((Nb, 2 * Cout, HW), lambda b: (b, 0, 0)),
        ),
        compiler_params=pltpu.CompilerParams(
            dimension_semantics=("parallel",),
            vmem_limit_bytes=vmem_limit,
        ),
    )(x_flat, w1, w2_flat, affine)

    # Interleave even/odd rows back to the PyTorch layout:
    # (N, 2*Cout, HW) -> (N, 2, Cout, H, W) -> (N, Cout, H, 2, W) -> (N, Cout, 2H, W).
    # If the downstream consumer accepts the even/odd-separated layout, this
    # extra HBM round-trip can be dropped or fused into the consumer.
    out = out.reshape(N, 2, Cout, H, W).transpose(0, 2, 3, 1, 4)
    return out.reshape(N, Cout, 2 * H, W)


def _reference_forward(x, w1, gamma1, beta1, w2_stack, gamma2, beta2):
    """Pure-JAX mirror of the PyTorch forward, for correctness checking."""
    N, Cin2, H, W = x.shape
    Cmid = w1.shape[0]
    Cout = w2_stack.shape[1]

    # in_conv: 1x1 conv
    y = jnp.einsum('mc,nchw->nmhw', w1, x)
    mean1 = y.mean(axis=(2, 3), keepdims=True)
    var1 = ((y - mean1) ** 2).mean(axis=(2, 3), keepdims=True)
    y = (y - mean1) / jnp.sqrt(var1 + EPS)
    y = y * gamma1.reshape(1, Cmid, 1, 1) + beta1.reshape(1, Cmid, 1, 1)
    y = jnp.where(y >= 0, y, NEG_SLOPE * y)

    # out_conv: ConvTranspose2d (2,1) stride (2,1)
    even = jnp.einsum('om,nmhw->nohw', w2_stack[0], y)
    odd = jnp.einsum('om,nmhw->nohw', w2_stack[1], y)
    z = jnp.stack([even, odd], axis=3)                 # (N, Cout, H, 2, W)
    z = z.reshape(N, Cout, 2 * H, W)
    mean2 = z.mean(axis=(2, 3), keepdims=True)
    var2 = ((z - mean2) ** 2).mean(axis=(2, 3), keepdims=True)
    z = (z - mean2) / jnp.sqrt(var2 + EPS)
    z = z * gamma2.reshape(1, Cout, 1, 1) + beta2.reshape(1, Cout, 1, 1)
    return jnp.where(z >= 0, z, NEG_SLOPE * z)


if __name__ == "__main__":
    # Module hyper-params (small, consistent with the forward):
    input_channel = 2          # module input has input_channel * 2 channels
    middle_channel = 8
    output_channel = 4
    N, H, W = 2, 16, 16
    Cin2 = input_channel * 2

    key = jax.random.PRNGKey(0)
    kx, kw1, kg1, kb1, kw2, kg2, kb2 = jax.random.split(key, 7)

    x = jax.random.normal(kx, (N, Cin2, H, W), dtype=jnp.float32)

    # Conv2d(Cin2 -> Cmid, 1x1, bias=False) weight, (Cmid, Cin2, 1, 1) -> (Cmid, Cin2)
    w1 = 0.2 * jax.random.normal(kw1, (middle_channel, Cin2), dtype=jnp.float32)
    # InstanceNorm2d(Cmid, affine=True)
    gamma1 = 1.0 + 0.1 * jax.random.normal(kg1, (middle_channel,), dtype=jnp.float32)
    beta1 = 0.1 * jax.random.normal(kb1, (middle_channel,), dtype=jnp.float32)
    # ConvTranspose2d weight (Cmid, Cout, 2, 1): stack as (2, Cout, Cmid),
    # w2_stack[kh] = W[:, :, kh, 0].T
    w2_pt = 0.2 * jax.random.normal(kw2, (middle_channel, output_channel, 2, 1),
                                    dtype=jnp.float32)
    w2_stack = jnp.transpose(w2_pt[:, :, :, 0], (2, 1, 0))   # (2, Cout, Cmid)
    # InstanceNorm2d(Cout, affine=True)
    gamma2 = 1.0 + 0.1 * jax.random.normal(kg2, (output_channel,), dtype=jnp.float32)
    beta2 = 0.1 * jax.random.normal(kb2, (output_channel,), dtype=jnp.float32)

    out = degateconv_audio_forward(x, w1, gamma1, beta1, w2_stack, gamma2, beta2)
    out = jax.block_until_ready(out)

    ref = _reference_forward(x, w1, gamma1, beta1, w2_stack, gamma2, beta2)
    assert out.shape == (N, output_channel, 2 * H, W), out.shape
    assert jnp.allclose(out, ref, atol=1e-4, rtol=1e-4), float(
        jnp.max(jnp.abs(out - ref)))

    print("KERNEL_OK")
</pallas_src>

<mosaic_0001>
module attributes {stable_mosaic.version = 11 : i64} {
  func.func @_degateconv_kernel(%arg0: i32, %arg1: memref<1x4x256xf32, #tpu.memory_space<vmem>>, %arg2: memref<8x4xf32, #tpu.memory_space<vmem>>, %arg3: memref<8x8xf32, #tpu.memory_space<vmem>>, %arg4: memref<24x1xf32, #tpu.memory_space<vmem>>, %arg5: memref<1x8x256xf32, #tpu.memory_space<vmem>>) attributes {dimension_semantics = [#tpu.dimension_semantics<parallel>], iteration_bounds = array<i64: 2>, scalar_prefetch = 0 : i64, scratch_operands = 0 : i64, tpu.core_type = #tpu.core_type<tc>, window_params = [{transform_indices = @transform_0, window_bounds = array<i64: 1, 4, 256>}, {pipeline_mode = #tpu.pipeline_mode<synchronous>, transform_indices = @transform_1, window_bounds = array<i64: 8, 4>}, {pipeline_mode = #tpu.pipeline_mode<synchronous>, transform_indices = @transform_2, window_bounds = array<i64: 8, 8>}, {pipeline_mode = #tpu.pipeline_mode<synchronous>, transform_indices = @transform_3, window_bounds = array<i64: 24, 1>}, {transform_indices = @transform_4, window_bounds = array<i64: 1, 8, 256>}]} {
    %c0 = arith.constant 0 : index
    %c0_0 = arith.constant 0 : index
    %0 = vector.load %arg2[%c0, %c0_0] : memref<8x4xf32, #tpu.memory_space<vmem>>, vector<8x4xf32>
    %c0_1 = arith.constant 0 : index
    %c0_2 = arith.constant 0 : index
    %1 = vector.load %arg3[%c0_1, %c0_2] : memref<8x8xf32, #tpu.memory_space<vmem>>, vector<8x8xf32>
    %c0_3 = arith.constant 0 : index
    %c0_4 = arith.constant 0 : index
    %2 = vector.load %arg4[%c0_3, %c0_4] : memref<24x1xf32, #tpu.memory_space<vmem>>, vector<24x1xf32>
    %3 = vector.extract_strided_slice %2 {offsets = [0, 0], sizes = [8, 1], strides = [1, 1]} : vector<24x1xf32> to vector<8x1xf32>
    %4 = vector.extract_strided_slice %2 {offsets = [8, 0], sizes = [8, 1], strides = [1, 1]} : vector<24x1xf32> to vector<8x1xf32>
    %5 = vector.extract_strided_slice %2 {offsets = [16, 0], sizes = [4, 1], strides = [1, 1]} : vector<24x1xf32> to vector<4x1xf32>
    %6 = vector.extract_strided_slice %2 {offsets = [20, 0], sizes = [4, 1], strides = [1, 1]} : vector<24x1xf32> to vector<4x1xf32>
    %c0_5 = arith.constant 0 : index
    %c0_6 = arith.constant 0 : index
    %c0_7 = arith.constant 0 : index
    %7 = vector.load %arg1[%c0_5, %c0_6, %c0_7] : memref<1x4x256xf32, #tpu.memory_space<vmem>>, vector<1x4x256xf32>
    %8 = vector.shape_cast %7 : vector<1x4x256xf32> to vector<4x256xf32>
    %cst = arith.constant dense<0.000000e+00> : vector<8x256xf32>
    %9 = tpu.matmul %0, %8, %cst {dimension_numbers = #tpu.dot_dimension_numbers<[1], [0], [0], [1], [0, 0, 1, 1], [], []>} : vector<8x4xf32>, vector<4x256xf32>, vector<8x256xf32> -> vector<8x256xf32>
    %cst_8 = arith.constant dense<0.000000e+00> : vector<8xf32>
    %10 = vector.multi_reduction <add>, %9, %cst_8 [1] : vector<8x256xf32> to vector<8xf32>
    %11 = vector.shape_cast %10 : vector<8xf32> to vector<8x1xf32>
    %12 = arith.mulf %9, %9 : vector<8x256xf32>
    %cst_9 = arith.constant dense<0.000000e+00> : vector<8xf32>
    %13 = vector.multi_reduction <add>, %12, %cst_9 [1] : vector<8x256xf32> to vector<8xf32>
    %14 = vector.shape_cast %13 : vector<8xf32> to vector<8x1xf32>
    %cst_10 = arith.constant 3.906250e-03 : f32
    %15 = vector.broadcast %cst_10 : f32 to vector<8x1xf32>
    %16 = arith.mulf %11, %15 : vector<8x1xf32>
    %cst_11 = arith.constant 3.906250e-03 : f32
    %17 = vector.broadcast %cst_11 : f32 to vector<8x1xf32>
    %18 = arith.mulf %14, %17 : vector<8x1xf32>
    %19 = arith.mulf %16, %16 : vector<8x1xf32>
    %20 = arith.subf %18, %19 : vector<8x1xf32>
    %cst_12 = arith.constant 0.000000e+00 : f32
    %21 = vector.broadcast %cst_12 : f32 to vector<8x1xf32>
    %22 = arith.maximumf %20, %21 : vector<8x1xf32>
    %cst_13 = arith.constant 9.99999974E-6 : f32
    %23 = vector.broadcast %cst_13 : f32 to vector<8x1xf32>
    %24 = arith.addf %22, %23 : vector<8x1xf32>
    %25 = math.rsqrt %24 : vector<8x1xf32>
    %26 = arith.mulf %3, %25 : vector<8x1xf32>
    %27 = arith.mulf %16, %26 : vector<8x1xf32>
    %28 = arith.subf %4, %27 : vector<8x1xf32>
    %29 = vector.broadcast %26 : vector<8x1xf32> to vector<8x256xf32>
    %30 = arith.mulf %9, %29 : vector<8x256xf32>
    %31 = vector.broadcast %28 : vector<8x1xf32> to vector<8x256xf32>
    %32 = arith.addf %30, %31 : vector<8x256xf32>
    %cst_14 = arith.constant 3.000000e-01 : f32
    %33 = vector.broadcast %cst_14 : f32 to vector<8x256xf32>
    %34 = arith.mulf %33, %32 : vector<8x256xf32>
    %35 = arith.maximumf %32, %34 : vector<8x256xf32>
    %cst_15 = arith.constant dense<0.000000e+00> : vector<8x256xf32>
    %36 = tpu.matmul %1, %35, %cst_15 {dimension_numbers = #tpu.dot_dimension_numbers<[1], [0], [0], [1], [0, 0, 1, 1], [], []>} : vector<8x8xf32>, vector<8x256xf32>, vector<8x256xf32> -> vector<8x256xf32>
    %cst_16 = arith.constant dense<0.000000e+00> : vector<8xf32>
    %37 = vector.multi_reduction <add>, %36, %cst_16 [1] : vector<8x256xf32> to vector<8xf32>
    %38 = vector.shape_cast %37 : vector<8xf32> to vector<8x1xf32>
    %39 = arith.mulf %36, %36 : vector<8x256xf32>
    %cst_17 = arith.constant dense<0.000000e+00> : vector<8xf32>
    %40 = vector.multi_reduction <add>, %39, %cst_17 [1] : vector<8x256xf32> to vector<8xf32>
    %41 = vector.shape_cast %40 : vector<8xf32> to vector<8x1xf32>
    %42 = vector.extract_strided_slice %38 {offsets = [0, 0], sizes = [4, 1], strides = [1, 1]} : vector<8x1xf32> to vector<4x1xf32>
    %43 = vector.extract_strided_slice %38 {offsets = [4, 0], sizes = [4, 1], strides = [1, 1]} : vector<8x1xf32> to vector<4x1xf32>
    %44 = arith.addf %42, %43 : vector<4x1xf32>
    %45 = vector.extract_strided_slice %41 {offsets = [0, 0], sizes = [4, 1], strides = [1, 1]} : vector<8x1xf32> to vector<4x1xf32>
    %46 = vector.extract_strided_slice %41 {offsets = [4, 0], sizes = [4, 1], strides = [1, 1]} : vector<8x1xf32> to vector<4x1xf32>
    %47 = arith.addf %45, %46 : vector<4x1xf32>
    %cst_18 = arith.constant 0.001953125 : f32
    %48 = vector.broadcast %cst_18 : f32 to vector<4x1xf32>
    %49 = arith.mulf %44, %48 : vector<4x1xf32>
    %cst_19 = arith.constant 0.001953125 : f32
    %50 = vector.broadcast %cst_19 : f32 to vector<4x1xf32>
    %51 = arith.mulf %47, %50 : vector<4x1xf32>
    %52 = arith.mulf %49, %49 : vector<4x1xf32>
    %53 = arith.subf %51, %52 : vector<4x1xf32>
    %cst_20 = arith.constant 0.000000e+00 : f32
    %54 = vector.broadcast %cst_20 : f32 to vector<4x1xf32>
    %55 = arith.maximumf %53, %54 : vector<4x1xf32>
    %cst_21 = arith.constant 9.99999974E-6 : f32
    %56 = vector.broadcast %cst_21 : f32 to vector<4x1xf32>
    %57 = arith.addf %55, %56 : vector<4x1xf32>
    %58 = math.rsqrt %57 : vector<4x1xf32>
    %59 = arith.mulf %5, %58 : vector<4x1xf32>
    %60 = arith.mulf %49, %59 : vector<4x1xf32>
    %61 = arith.subf %6, %60 : vector<4x1xf32>
    %62 = tpu.concatenate %59, %59 in 0 : vector<4x1xf32>, vector<4x1xf32> -> vector<8x1xf32>
    %63 = tpu.concatenate %61, %61 in 0 : vector<4x1xf32>, vector<4x1xf32> -> vector<8x1xf32>
    %64 = vector.broadcast %62 : vector<8x1xf32> to vector<8x256xf32>
    %65 = arith.mulf %36, %64 : vector<8x256xf32>
    %66 = vector.broadcast %63 : vector<8x1xf32> to vector<8x256xf32>
    %67 = arith.addf %65, %66 : vector<8x256xf32>
    %cst_22 = arith.constant 3.000000e-01 : f32
    %68 = vector.broadcast %cst_22 : f32 to vector<8x256xf32>
    %69 = arith.mulf %68, %67 : vector<8x256xf32>
    %70 = arith.maximumf %67, %69 : vector<8x256xf32>
    %c0_23 = arith.constant 0 : index
    %c0_24 = arith.constant 0 : index
    %c0_25 = arith.constant 0 : index
    %71 = vector.load %arg5[%c0_23, %c0_24, %c0_25] : memref<1x8x256xf32, #tpu.memory_space<vmem>>, vector<1x8x256xf32>
    %72 = vector.shape_cast %71 : vector<1x8x256xf32> to vector<8x256xf32>
    %73 = vector.shape_cast %70 : vector<8x256xf32> to vector<1x8x256xf32>
    tpu.vector_store %arg5[%c0_23, %c0_24, %c0_25], %73 {strides = array<i32>} : memref<1x8x256xf32, #tpu.memory_space<vmem>>, vector<1x8x256xf32>,
    return
  }
  func.func @transform_0(%arg0: i32) -> (i32, i32, i32) {
    %c0_i32 = arith.constant 0 : i32
    %c0_i32_0 = arith.constant 0 : i32
    %c0_i32_1 = arith.constant 0 : i32
    return %arg0, %c0_i32, %c0_i32_0 : i32, i32, i32
  }
  func.func @transform_1(%arg0: i32) -> (i32, i32) {
    %c0_i32 = arith.constant 0 : i32
    %c0_i32_0 = arith.constant 0 : i32
    %c0_i32_1 = arith.constant 0 : i32
    return %c0_i32, %c0_i32_0 : i32, i32
  }
  func.func @transform_2(%arg0: i32) -> (i32, i32) {
    %c0_i32 = arith.constant 0 : i32
    %c0_i32_0 = arith.constant 0 : i32
    %c0_i32_1 = arith.constant 0 : i32
    return %c0_i32, %c0_i32_0 : i32, i32
  }
  func.func @transform_3(%arg0: i32) -> (i32, i32) {
    %c0_i32 = arith.constant 0 : i32
    %c0_i32_0 = arith.constant 0 : i32
    %c0_i32_1 = arith.constant 0 : i32
    return %c0_i32, %c0_i32_0 : i32, i32
  }
  func.func @transform_4(%arg0: i32) -> (i32, i32, i32) {
    %c0_i32 = arith.constant 0 : i32
    %c0_i32_0 = arith.constant 0 : i32
    %c0_i32_1 = arith.constant 0 : i32
    return %arg0, %c0_i32, %c0_i32_0 : i32, i32, i32
  }
}

</mosaic_0001>

<llo_original>
// kernel: degateconv_audio_forward.1
$region0: #{degateconv_audio_forward.1}
  #allocation0 [shape = 'u32[]', space=smem, size = 0x4, offset = 0x4, fixed_abs, tag = 'smem constant byte address 0x4 - core index']
  #allocation1 [shape = 'u32[144,128]{1,0:T(1,128)}', space=vmem, size = 0x12000, scoped, tag = 'internal scratch']
  %s0 = inlined_call_operand.vmem [shape: f32[2,4,256], index: 0, kind: input, shape index: {}]
  %s1 = inlined_call_operand.vmem [shape: f32[8,4], index: 1, kind: input, shape index: {}]
  %s2 = inlined_call_operand.vmem [shape: f32[8,8], index: 2, kind: input, shape index: {}]
  %s3 = inlined_call_operand.vmem [shape: f32[24,1], index: 3, kind: input, shape index: {}]
  %s4 = inlined_call_operand.vmem [shape: f32[2,8,256], index: 4, kind: output, shape index: {}]
  %s5 = sld [smem:[#allocation0]]
  $region49: #{degateconv_audio_forward.1} parent=0
    _
  %s7 = ssub.s32 1, %s5
  %s8 = scalar_select 0, %s7, %s5
  loop: start=0, step=1, limit=4
  $region2: #{degateconv_audio_forward.1} parent=0 // loop_pre_header
    _
  $region3: #{degateconv_audio_forward.1} parent=0 // loop_header
    %s10 = sphi 0, %s14
    %p11 = scmp.ge.s32.totalorder %s10, 4
    %s20 = sphi 0, %s22
    %s23 = sphi 0, %s20
    %s24 = sphi 0, %s23
    %s40 = sphi 0, %s24
    %s44 = sphi 0, %s44
    %s46 = sphi 0, %s44
    %s47 = sphi 0, %s46
    %s61 = sphi 0, %s47
    %s65 = sphi 0, %s65
    %s67 = sphi 0, %s65
    %s68 = sphi 0, %s67
    %s82 = sphi 0, %s68
    %s86 = sphi 0, %s86
    %s88 = sphi 0, %s86
    %s89 = sphi 0, %s88
    %s103 = sphi 0, %s89
    %s109 = sphi 0, %s111
    %s112 = sphi 0, %s109
    %s113 = sphi 0, %s112
    %s129 = sphi 0, %s113
  $region4: #{degateconv_audio_forward.1} parent=0 // loop_header_branch
    %13 = sbr.rel (%p11) target = $region8
  $region5: #{degateconv_audio_forward.1} parent=0 // loop_body
    %s15 = ssub.s32 %s10, 1
    %s16 = ssub.s32 %s10, 2
    %s17 = sadd.s32 %s10, 1
    %s18 = ssub.s32 %s10, %s17
    %p19 = scmp.eq.s32.totalorder %s18, 0
    %s21 = sadd.s32 %s20, 1
    %s22 = scalar_select %p19, %s20, %s21
    %p25 = pneg %p19
    %p26 = scmp.eq.s32.totalorder %s10, 1
    %p27 = por %p25, %p26
    %p28 = scmp.ne.s32.totalorder %s20, %s23
    %p29 = scmp.eq.s32.totalorder %s10, 0
    %p30 = por %p28, %p29
    %p31 = scmp.ne.s32.totalorder %s20, %s23
    %p32 = scmp.eq.s32.totalorder %s15, 1
    %p33 = por %p31, %p32
    %p34 = scmp.ne.s32.totalorder %s23, %s24
    %p35 = scmp.eq.s32.totalorder %s15, 0
    %p36 = por %p34, %p35
    %p37 = scmp.ne.s32.totalorder %s23, %s24
    %p38 = scmp.eq.s32.totalorder %s16, 1
    %p39 = por %p37, %p38
    %p41 = scmp.ne.s32.totalorder %s24, %s40
    %p42 = scmp.eq.s32.totalorder %s16, 0
    %p43 = por %p41, %p42
    %s45 = sadd.s32 %s44, 1
    %p48 = scmp.eq.s32.totalorder %s10, 1
    %p49 = scmp.ne.s32.totalorder %s44, %s46
    %p50 = scmp.eq.s32.totalorder %s10, 0
    %p51 = por %p49, %p50
    %p52 = scmp.ne.s32.totalorder %s44, %s46
    %p53 = scmp.eq.s32.totalorder %s15, 1
    %p54 = por %p52, %p53
    %p55 = scmp.ne.s32.totalorder %s46, %s47
    %p56 = scmp.eq.s32.totalorder %s15, 0
    %p57 = por %p55, %p56
    %p58 = scmp.ne.s32.totalorder %s46, %s47
    %p59 = scmp.eq.s32.totalorder %s16, 1
    %p60 = por %p58, %p59
    %p62 = scmp.ne.s32.totalorder %s47, %s61
    %p63 = scmp.eq.s32.totalorder %s16, 0
    %p64 = por %p62, %p63
    %s66 = sadd.s32 %s65, 1
    %p69 = scmp.eq.s32.totalorder %s10, 1
    %p70 = scmp.ne.s32.totalorder %s65, %s67
    %p71 = scmp.eq.s32.totalorder %s10, 0
    %p72 = por %p70, %p71
    %p73 = scmp.ne.s32.totalorder %s65, %s67
    %p74 = scmp.eq.s32.totalorder %s15, 1
    %p75 = por %p73, %p74
    %p76 = scmp.ne.s32.totalorder %s67, %s68
    %p77 = scmp.eq.s32.totalorder %s15, 0
    %p78 = por %p76, %p77
    %p79 = scmp.ne.s32.totalorder %s67, %s68
    %p80 = scmp.eq.s32.totalorder %s16, 1
    %p81 = por %p79, %p80
    %p83 = scmp.ne.s32.totalorder %s68, %s82
    %p84 = scmp.eq.s32.totalorder %s16, 0
    %p85 = por %p83, %p84
    %s87 = sadd.s32 %s86, 1
    %p90 = scmp.eq.s32.totalorder %s10, 1
    %p91 = scmp.ne.s32.totalorder %s86, %s88
    %p92 = scmp.eq.s32.totalorder %s10, 0
    %p93 = por %p91, %p92
    %p94 = scmp.ne.s32.totalorder %s86, %s88
    %p95 = scmp.eq.s32.totalorder %s15, 1
    %p96 = por %p94, %p95
    %p97 = scmp.ne.s32.totalorder %s88, %s89
    %p98 = scmp.eq.s32.totalorder %s15, 0
    %p99 = por %p97, %p98
    %p100 = scmp.ne.s32.totalorder %s88, %s89
    %p101 = scmp.eq.s32.totalorder %s16, 1
    %p102 = por %p100, %p101
    %p104 = scmp.ne.s32.totalorder %s89, %s103
    %p105 = scmp.eq.s32.totalorder %s16, 0
    %p106 = por %p104, %p105
    %s107 = ssub.s32 %s10, %s17
    %p108 = scmp.eq.s32.totalorder %s107, 0
    %s110 = sadd.s32 %s109, 1
    %s111 = scalar_select %p108, %s109, %s110
    %p114 = pneg %p108
    %p115 = scmp.eq.s32.totalorder %s10, 1
    %p116 = por %p114, %p115
    %p117 = scmp.ne.s32.totalorder %s109, %s112
    %p118 = scmp.eq.s32.totalorder %s10, 0
    %p119 = por %p117, %p118
    %p120 = scmp.ne.s32.totalorder %s109, %s112
    %p121 = scmp.eq.s32.totalorder %s15, 1
    %p122 = por %p120, %p121
    %p123 = scmp.ne.s32.totalorder %s112, %s113
    %p124 = scmp.eq.s32.totalorder %s15, 0
    %p125 = por %p123, %p124
    %p126 = scmp.ne.s32.totalorder %s112, %s113
    %p127 = scmp.eq.s32.totalorder %s16, 1
    %p128 = por %p126, %p127
    %p130 = scmp.ne.s32.totalorder %s113, %s129
    %p131 = scmp.eq.s32.totalorder %s16, 0
    %p132 = por %p130, %p131
    %p133 = scmp.le.s32.totalorder 1, %s10
    %p134 = scmp.lt.s32.totalorder %s10, 3
    %p135 = pnand %p133, %p134
    %p136 = pneg %p135
    // Predicated region
    $region9: #{degateconv_audio_forward.1} parent=5 // pred_check
      _
    $region10: #{degateconv_audio_forward.1} parent=5 // pred_check_branch
      %138 = sbr.rel (%p135) target = $region12
    $region11: #{degateconv_audio_forward.1} parent=5 // pred_region
      %s139 = ssub.s32 %s10, 1
      // Predicated region
      $region13: #{degateconv_audio_forward.1} parent=11 // pred_check
        %p140 = pneg %p57
      $region14: #{degateconv_audio_forward.1} parent=11 // pred_check_branch
        %142 = sbr.rel (%p140) target = $region16
      $region15: #{degateconv_audio_forward.1} parent=11 // pred_region
        _
      $region16: #{degateconv_audio_forward.1} parent=11 // pred_fallthru
        _
      // Predicated region
      $region17: #{degateconv_audio_forward.1} parent=11 // pred_check
        %p143 = pneg %p78
      $region18: #{degateconv_audio_forward.1} parent=11 // pred_check_branch
        %145 = sbr.rel (%p143) target = $region20
      $region19: #{degateconv_audio_forward.1} parent=11 // pred_region
        _
      $region20: #{degateconv_audio_forward.1} parent=11 // pred_fallthru
        _
      // Predicated region
      $region21: #{degateconv_audio_forward.1} parent=11 // pred_check
        %p146 = pneg %p99
      $region22: #{degateconv_audio_forward.1} parent=11 // pred_check_branch
        %148 = sbr.rel (%p146) target = $region24
      $region23: #{degateconv_audio_forward.1} parent=11 // pred_region
        _
      $region24: #{degateconv_audio_forward.1} parent=11 // pred_fallthru
        _
    $region12: #{degateconv_audio_forward.1} parent=5 // pred_fallthru
      _
    %p149 = scmp.lt.s32.totalorder %s10, 2
    // Predicated region
    $region25: #{degateconv_audio_forward.1} parent=5 // pred_check
      %p150 = pneg %p149
    $region26: #{degateconv_audio_forward.1} parent=5 // pred_check_branch
      %152 = sbr.rel (%p150) target = $region28
    $region27: #{degateconv_audio_forward.1} parent=5 // pred_region
      // Predicated region
      $region29: #{degateconv_audio_forward.1} parent=27 // pred_check
        %p153 = pneg %p30
      $region30: #{degateconv_audio_forward.1} parent=27 // pred_check_branch
        %155 = sbr.rel (%p153) target = $region32
      $region31: #{degateconv_audio_forward.1} parent=27 // pred_region
        %p156 = scmp.lt.s32.totalorder %s10, 1
        %s157 = scalar_select %p156, %s10, 1
        %s158 = smul.addr %s157, 2
        %s159 = smul.addr %s158, 4
        %s160 = scalar_lea.vmem %s0, %s159
      $region32: #{degateconv_audio_forward.1} parent=27 // pred_fallthru
        _
    $region28: #{degateconv_audio_forward.1} parent=5 // pred_fallthru
      _
    %p161 = scmp.le.s32.totalorder 1, %s10
    %p162 = scmp.lt.s32.totalorder %s10, 3
    %p163 = pnand %p161, %p162
    %p164 = pneg %p163
    // Predicated region
    $region33: #{degateconv_audio_forward.1} parent=5 // pred_check
      _
    $region34: #{degateconv_audio_forward.1} parent=5 // pred_check_branch
      %166 = sbr.rel (%p163) target = $region36
    $region35: #{degateconv_audio_forward.1} parent=5 // pred_region
      %s167 = ssub.s32 %s10, 1
      %p168 = scmp.lt.s32.totalorder %s15, 1
      %s169 = scalar_select %p168, %s15, 1
      %s170 = smul.addr %s169, 2
      %s171 = smul.addr %s170, 4
      %s172 = scalar_lea.vmem %s0, %s171
      %p173 = pneg %p36
      %p174 = pneg %p33
      %p175 = pneg %p57
      %p176 = pneg %p54
      %p177 = pneg %p78
      %p178 = pneg %p75
      %p179 = pneg %p99
      %p180 = pneg %p96
      %p181 = pneg %p125
      %p182 = pneg %p122
      %p183 = scmp.lt.s32.totalorder %s15, 1
      %s184 = scalar_select %p183, %s15, 1
      %s185 = smul.addr %s184, 2
      %s186 = smul.addr %s185, 8
      %s187 = scalar_lea.vmem %s4, %s186
      %p188 = scmp.lt.s32.totalorder %s15, 1
      %s189 = scalar_select %p188, %s15, 1
      %s190 = smul.addr %s189, 2
      %s191 = smul.addr %s190, 4
      %s192 = scalar_lea.vmem %s0, %s191
      %p193 = scmp.lt.s32.totalorder %s15, 1
      %s194 = scalar_select %p193, %s15, 1
      %s195 = smul.addr %s194, 2
      %s196 = smul.addr %s195, 8
      %s197 = scalar_lea.vmem %s4, %s196
      %v198 = vld [vmem:[%s1] sm:$0xff]
      %v199 = vld [vmem:[%s2] sm:$0xff]
      %v200 = vld [vmem:[%s3] sm:$0xff]
      %v201 = vld [vmem:[%s3 + $0x8] sm:$0xff]
      %v202 = vld [vmem:[%s3 + $0x10] sm:$0xff]
      %v203 = vld [vmem:[%s192] sm:$0xff]
      %v205 = vcombine.high %v203, %v203
      %vm206 = vcmask 31744
      %v208 = vsel %vm206, %v198, 0
      %vm210 = vcmask 1043456
      %v211 = vsel %vm210, %v203, 0
      %v213 = vsel %vm210, %v205, 0
      %215 = vmatprep.subr.mxu0 %v213
      %216 = vmatpush1.msra.mxu0 %v211
      %217 = vmatprep.subr.mxu0 0.0
      %218 = vmatpush1.msra.mxu0 0.0
      %219 = vmatprep.subr.mxu0 0.0
      %220 = vmatpush1.msra.mxu0 0.0
      %221 = vmatprep.subr.mxu0 0.0
      %222 = vmatpush1.msra.mxu0 0.0
      %223 = vmatprep.subr.mxu0 0.0
      %224 = vmatpush1.msra.mxu0 0.0
      %225 = vmatprep.subr.mxu0 0.0
      %226 = vmatpush1.msra.mxu0 0.0
      %227 = vmatprep.subr.mxu0 0.0
      %228 = vmatpush1.msra.mxu0 0.0
      %229 = vmatprep.subr.mxu0 0.0
      %230 = vmatpush1.msra.mxu0 0.0
      %231 = vmatprep.subr.mxu0 0.0
      %232 = vmatpush1.msra.mxu0 0.0
      %233 = vmatprep.subr.mxu0 0.0
      %234 = vmatpush1.msra.mxu0 0.0
      %235 = vmatprep.subr.mxu0 0.0
      %236 = vmatpush1.msra.mxu0 0.0
      %237 = vmatprep.subr.mxu0 0.0
      %238 = vmatpush1.msra.mxu0 0.0
      %239 = vmatprep.subr.mxu0 0.0
      %240 = vmatpush1.msra.mxu0 0.0
      %241 = vmatprep.subr.mxu0 0.0
      %242 = vmatpush1.msra.mxu0 0.0
      %243 = vmatprep.subr.mxu0 0.0
      %244 = vmatpush1.msra.mxu0 0.0
      %245 = vmatprep.subr.mxu0 0.0
      %246 = vmatpush1.msra.mxu0 0.0
      %247 = vmatprep.subr.mxu0 0.0
      %248 = vmatpush1.msra.mxu0 0.0
      %249 = vmatprep.subr.mxu0 0.0
      %250 = vmatpush1.msra.mxu0 0.0
      %251 = vmatprep.subr.mxu0 0.0
      %252 = vmatpush1.msra.mxu0 0.0
      %253 = vmatprep.subr.mxu0 0.0
      %254 = vmatpush1.msra.mxu0 0.0
      %255 = vmatprep.subr.mxu0 0.0
      %256 = vmatpush1.msra.mxu0 0.0
      %257 = vmatprep.subr.mxu0 0.0
      %258 = vmatpush1.msra.mxu0 0.0
      %259 = vmatprep.subr.mxu0 0.0
      %260 = vmatpush1.msra.mxu0 0.0
      %261 = vmatprep.subr.mxu0 0.0
      %262 = vmatpush1.msra.mxu0 0.0
      %263 = vmatprep.subr.mxu0 0.0
      %264 = vmatpush1.msra.mxu0 0.0
      %265 = vmatprep.subr.mxu0 0.0
      %266 = vmatpush1.msra.mxu0 0.0
      %267 = vmatprep.subr.mxu0 0.0
      %268 = vmatpush1.msra.mxu0 0.0
      %269 = vmatprep.subr.mxu0 0.0
      %270 = vmatpush1.msra.mxu0 0.0
      %271 = vmatprep.subr.mxu0 0.0
      %272 = vmatpush1.msra.mxu0 0.0
      %273 = vmatprep.subr.mxu0 0.0
      %274 = vmatpush1.msra.mxu0 0.0
      %275 = vmatprep.subr.mxu0 0.0
      %276 = vmatpush1.msra.mxu0 0.0
      %277 = vmatprep.subr.mxu0 0.0
      %278 = vmatpush1.msra.mxu0 0.0
      %279 = vmatprep.mubr.f32.mxu0 0.0
      %280 = vmatmul.mubr.f32.gmra.mrb[0].mxu0 %v208
      %v281 = vpop.f32.mrb[0].mxu0
      %v282 = vadd.f32 0.0, %v281
      %v283 = vpop.f32.mrb[0].mxu0
      %v284 = vadd.f32 0.0, %v283
      %285 = vdwg.mxu0
      %v286 = vadd.f32 %v282, %v284
      %287 = vadd.xlane.f32.xlu0 %v286
      %v288 = vpop.xlane.xlu0 %287
      %v289 = vmul.f32 %v282, %v282
      %v290 = vmul.f32 %v284, %v284
      %v291 = vadd.f32 %v289, %v290
      %292 = vadd.xlane.f32.xlu0 %v291
      %v293 = vpop.xlane.xlu0 %292
      %v294 = vmul.f32 %v288, 0.00390625
      %v295 = vmul.f32 %v293, 0.00390625
      %v296 = vmul.f32 %v294, %v294
      %v297 = vsub.f32 %v295, %v296
      %v298 = vmax.f32 %v297, 0.0
      %v299 = vadd.f32 %v298, 1e-05
      %v300 = vrsqrt.pop %v299
      %v301 = vmul.f32 %v200, %v300
      %v302 = vmul.f32 %v294, %v301
      %v303 = vsub.f32 %v201, %v302
      %305 = vset.pattern.permute.xlu0 0
      %306 = vperm.xlu0 %305, %v301
      %v307 = vpop.permute.xlu0 %306
      %v309 = vmul.f32 %v282, %v307
      %v310 = vmul.f32 %v284, %v307
      %312 = vset.pattern.permute.xlu0 0
      %313 = vperm.xlu0 %312, %v303
      %v314 = vpop.permute.xlu0 %313
      %v316 = vadd.f32 %v309, %v314
      %v317 = vadd.f32 %v310, %v314
      %v318 = vmul.f32 %v316, 0.3
      %v319 = vmul.f32 %v317, 0.3
      %v320 = vmax.f32 %v316, %v318
      %v321 = vmax.f32 %v317, %v319
      %vm322 = vcmask 64512
      %v324 = vsel %vm322, %v199, 0
      %326 = vmatprep.subr.mxu0 %v321
      %327 = vmatpush1.msra.mxu0 %v320
      %328 = vmatprep.subr.mxu0 0.0
      %329 = vmatpush1.msra.mxu0 0.0
      %330 = vmatprep.subr.mxu0 0.0
      %331 = vmatpush1.msra.mxu0 0.0
      %332 = vmatprep.subr.mxu0 0.0
      %333 = vmatpush1.msra.mxu0 0.0
      %334 = vmatprep.subr.mxu0 0.0
      %335 = vmatpush1.msra.mxu0 0.0
      %336 = vmatprep.subr.mxu0 0.0
      %337 = vmatpush1.msra.mxu0 0.0
      %338 = vmatprep.subr.mxu0 0.0
      %339 = vmatpush1.msra.mxu0 0.0
      %340 = vmatprep.subr.mxu0 0.0
      %341 = vmatpush1.msra.mxu0 0.0
      %342 = vmatprep.subr.mxu0 0.0
      %343 = vmatpush1.msra.mxu0 0.0
      %344 = vmatprep.subr.mxu0 0.0
      %345 = vmatpush1.msra.mxu0 0.0
      %346 = vmatprep.subr.mxu0 0.0
      %347 = vmatpush1.msra.mxu0 0.0
      %348 = vmatprep.subr.mxu0 0.0
      %349 = vmatpush1.msra.mxu0 0.0
      %350 = vmatprep.subr.mxu0 0.0
      %351 = vmatpush1.msra.mxu0 0.0
      %352 = vmatprep.subr.mxu0 0.0
      %353 = vmatpush1.msra.mxu0 0.0
      %354 = vmatprep.subr.mxu0 0.0
      %355 = vmatpush1.msra.mxu0 0.0
      %356 = vmatprep.subr.mxu0 0.0
      %357 = vmatpush1.msra.mxu0 0.0
      %358 = vmatprep.subr.mxu0 0.0
      %359 = vmatpush1.msra.mxu0 0.0
      %360 = vmatprep.subr.mxu0 0.0
      %361 = vmatpush1.msra.mxu0 0.0
      %362 = vmatprep.subr.mxu0 0.0
      %363 = vmatpush1.msra.mxu0 0.0
      %364 = vmatprep.subr.mxu0 0.0
      %365 = vmatpush1.msra.mxu0 0.0
      %366 = vmatprep.subr.mxu0 0.0
      %367 = vmatpush1.msra.mxu0 0.0
      %368 = vmatprep.subr.mxu0 0.0
      %369 = vmatpush1.msra.mxu0 0.0
      %370 = vmatprep.subr.mxu0 0.0
      %371 = vmatpush1.msra.mxu0 0.0
      %372 = vmatprep.subr.mxu0 0.0
      %373 = vmatpush1.msra.mxu0 0.0
      %374 = vmatprep.subr.mxu0 0.0
      %375 = vmatpush1.msra.mxu0 0.0
      %376 = vmatprep.subr.mxu0 0.0
      %377 = vmatpush1.msra.mxu0 0.0
      %378 = vmatprep.subr.mxu0 0.0
      %379 = vmatpush1.msra.mxu0 0.0
      %380 = vmatprep.subr.mxu0 0.0
      %381 = vmatpush1.msra.mxu0 0.0
      %382 = vmatprep.subr.mxu0 0.0
      %383 = vmatpush1.msra.mxu0 0.0
      %384 = vmatprep.subr.mxu0 0.0
      %385 = vmatpush1.msra.mxu0 0.0
      %386 = vmatprep.subr.mxu0 0.0
      %387 = vmatpush1.msra.mxu0 0.0
      %388 = vmatprep.subr.mxu0 0.0
      %389 = vmatpush1.msra.mxu0 0.0
      %390 = vmatprep.mubr.f32.mxu0 0.0
      %391 = vmatmul.mubr.f32.gmra.mrb[0].mxu0 %v324
      %v392 = vpop.f32.mrb[0].mxu0
      %v393 = vadd.f32 0.0, %v392
      %v394 = vpop.f32.mrb[0].mxu0
      %v395 = vadd.f32 0.0, %v394
      %396 = vdwg.mxu0
      %v397 = vadd.f32 %v393, %v395
      %398 = vadd.xlane.f32.xlu0 %v397
      %v399 = vpop.xlane.xlu0 %398
      %v400 = vmul.f32 %v393, %v393
      %v401 = vmul.f32 %v395, %v395
      %v402 = vadd.f32 %v400, %v401
      %403 = vadd.xlane.f32.xlu0 %v402
      %v404 = vpop.xlane.xlu0 %403
      %v406 = vrot.slane %v399, 4
      %v408 = vadd.f32 %v399, %v406
      %v410 = vrot.slane %v404, 4
      %v412 = vadd.f32 %v404, %v410
      %v413 = vmul.f32 %v408, 0.001953125
      %v414 = vmul.f32 %v412, 0.001953125
      %v415 = vmul.f32 %v413, %v413
      %v416 = vsub.f32 %v414, %v415
      %v417 = vmax.f32 %v416, 0.0
      %v418 = vadd.f32 %v417, 1e-05
      %v419 = vrsqrt.pop %v418
      %v420 = vmul.f32 %v202, %v419
      %v421 = vmul.f32 %v413, %v420
      %v423 = vrot.slane %v421, 4
      %v425 = vsub.f32 %v202, %v423
      %v427 = vrot.slane %v420, 4
      %v429 = vsel %vm210, %v420, %v427
      %v431 = vrot.slane %v425, 4
      %v433 = vsel %vm210, %v431, %v425
      %435 = vset.pattern.permute.xlu0 0
      %436 = vperm.xlu0 %435, %v429
      %v437 = vpop.permute.xlu0 %436
      %v439 = vmul.f32 %v393, %v437
      %v440 = vmul.f32 %v395, %v437
      %442 = vset.pattern.permute.xlu0 0
      %443 = vperm.xlu0 %442, %v433
      %v444 = vpop.permute.xlu0 %443
      %v446 = vadd.f32 %v439, %v444
      %v447 = vadd.f32 %v440, %v444
      %v448 = vmul.f32 %v446, 0.3
      %v449 = vmul.f32 %v447, 0.3
      %v450 = vmax.f32 %v446, %v448
      %v451 = vmax.f32 %v447, %v449
      %452 = vst [vmem:[%s197] sm:$0xff] %v450
      %453 = vst [vmem:[%s197 + $0x8] sm:$0xff] %v451
      %p454 = scmp.lt.s32.totalorder %s15, 1
      %s455 = scalar_select %p454, %s15, 1
      %s456 = smul.addr %s455, 2
      %s457 = smul.addr %s456, 8
      %s458 = scalar_lea.vmem %s4, %s457
      // Predicated region
      $region37: #{degateconv_audio_forward.1} parent=35 // pred_check
        %p459 = pneg %p122
      $region38: #{degateconv_audio_forward.1} parent=35 // pred_check_branch
        %461 = sbr.rel (%p459) target = $region40
      $region39: #{degateconv_audio_forward.1} parent=35 // pred_region
        _
      $region40: #{degateconv_audio_forward.1} parent=35 // pred_fallthru
        _
    $region36: #{degateconv_audio_forward.1} parent=5 // pred_fallthru
      _
    %p462 = scmp.le.s32.totalorder 2, %s10
    // Predicated region
    $region41: #{degateconv_audio_forward.1} parent=5 // pred_check
      %p463 = pneg %p462
    $region42: #{degateconv_audio_forward.1} parent=5 // pred_check_branch
      %465 = sbr.rel (%p463) target = $region44
    $region43: #{degateconv_audio_forward.1} parent=5 // pred_region
      %s466 = ssub.s32 %s10, 2
      // Predicated region
      $region45: #{degateconv_audio_forward.1} parent=43 // pred_check
        %p467 = pneg %p128
      $region46: #{degateconv_audio_forward.1} parent=43 // pred_check_branch
        %469 = sbr.rel (%p467) target = $region48
      $region47: #{degateconv_audio_forward.1} parent=43 // pred_region
        %p470 = scmp.lt.s32.totalorder %s16, 1
        %s471 = scalar_select %p470, %s16, 1
        %s472 = smul.addr %s471, 2
        %s473 = smul.addr %s472, 8
        %s474 = scalar_lea.vmem %s4, %s473
      $region48: #{degateconv_audio_forward.1} parent=43 // pred_fallthru
        _
    $region44: #{degateconv_audio_forward.1} parent=5 // pred_fallthru
      _
  $region6: #{degateconv_audio_forward.1} parent=0 // loop_footer
    %s14 = sadd.s32 1, %s10
  $region7: #{degateconv_audio_forward.1} parent=0 // loop_footer_branch
    %9 = sbr.rel target = $region3
  $region8: #{degateconv_audio_forward.1} parent=0 // loop_exit
    _

</llo_original>
